<compile_context>
chip_gen: v6e
topology: v6e:2x2x1
jax: 0.10.0
libtpu: 0.0.40
codegen_flags: <defaults>
</compile_context>

<pallas_src>
import functools

import jax
import jax.numpy as jnp
from jax.experimental import pallas as pl
from jax.experimental.pallas import tpu as pltpu

EPS = 1e-12


def _round_up(x: int, m: int) -> int:
    return ((x + m - 1) // m) * m


def _group_scale(d_sq, w):
    """Per-(node, hidden) multiplicative scale implementing max_min_norm with
    the layer weight folded in.

    d_sq: (TN, H) squared L2 norm over the group's vector channels.
    w:    (1, H) layer weight (f32).
    Returns s such that out_channel = vec_channel * s ==
        relu((dist - min)/delta) * vec/dist * weight,
    with dist clamped to EPS and min/max over the hidden (lane) axis.
    """
    # inv_dist == 1 / max(dist, EPS) exactly, via EUP rsqrt (no sqrt + divide).
    inv_dist = jax.lax.rsqrt(jnp.maximum(d_sq, EPS * EPS))       # (TN, H)
    dist = jnp.maximum(d_sq * inv_dist, EPS)                     # (TN, H)
    max_val = jnp.max(dist, axis=-1, keepdims=True)              # (TN, 1) XLU
    min_val = jnp.min(dist, axis=-1, keepdims=True)              # (TN, 1)
    delta = max_val - min_val
    delta = jnp.where(delta == 0.0, jnp.ones_like(delta), delta)
    inv_delta = pl.reciprocal(delta)                             # (TN, 1) EUP
    normed = jnp.maximum((dist - min_val) * inv_delta, 0.0)
    # torch's `(dist == 0).all()` early return is redundant here: an all-zero
    # group gives normed == 0 and hence an exactly-zero output on this path.
    return normed * inv_dist * w


def _vec_layer_norm_kernel(v_ref, w_ref, o_ref, *, splits, h, norm_type):
    # v_ref/o_ref: (TN, L*H) with the L vector channels flattened onto the
    # lane axis (lane-dense loads/stores).  w_ref: (1, H) f32, VMEM-resident.
    v = v_ref[...].astype(jnp.float32)
    w = w_ref[...]
    if norm_type == "max_min":
        pieces = []
        c0 = 0
        for g in splits:                 # contiguous channel groups, e.g. (3, 5)
            d_sq = None
            for c in range(c0, c0 + g):  # static lane slices of width H
                x = v[:, c * h:(c + 1) * h]
                d_sq = x * x if d_sq is None else d_sq + x * x
            s = _group_scale(d_sq, w)    # (TN, H), weight already folded in
            pieces.extend([s] * g)
            c0 += g
        scale = jnp.concatenate(pieces, axis=-1)           # (TN, L*H)
        o_ref[...] = (v * scale).astype(o_ref.dtype)
    else:
        w_full = jnp.concatenate([w] * sum(splits), axis=-1)    # (1, L*H)
        o_ref[...] = (v * w_full).astype(o_ref.dtype)


def vec_layer_norm(vec, weight, norm_type="max_min", *, row_tile=None):
    """Forward pass of VecLayerNorm.

    vec:    (N, L, H) with L in {3, 8}; any float dtype (compute is f32).
    weight: (H,)
    Returns (N, L, H) in vec.dtype.
    """
    if norm_type not in ("max_min", None):
        raise ValueError(f"unsupported norm_type {norm_type!r}")
    n, l, h = vec.shape
    if l == 3:
        splits = (3,)
    elif l == 8:
        splits = (3, 5)
    else:
        raise ValueError(
            f"'VecLayerNorm' only supports 3 or 8 channels (got {l})")

    lw = l * h
    # Free, contiguous reshape: the L vector channels land on the lane axis so
    # every block is lane-dense instead of an (L, H)->(8,128)-padded slab.
    vec2 = vec.reshape(n, lw)
    w = weight.astype(jnp.float32).reshape(1, h)
    out_dtype = vec.dtype
    itemsize = jnp.dtype(out_dtype).itemsize
    # Sublane granularity of the second-minor dim (8 for f32, 16 for bf16).
    row_align = 8 * max(1, 4 // itemsize)

    if row_tile is None:
        # Pallas double-buffers the vec input and the output block per grid
        # step; keep 2*(in+out) under ~12 MiB so it fits every generation's
        # default scoped-VMEM limit (16 MiB v5e, 32 MiB v6e/v7x) with headroom.
        lw_pad = _round_up(lw, 128)
        bytes_per_row = lw_pad * 2 * itemsize
        row_tile = int(max(row_align, min(2048, (12 << 20) // (2 * bytes_per_row))))

    tn = min(int(row_tile), n)
    if tn < n:
        # Keep >= ~8 grid steps so the DMA pipeline has work and the node grid
        # shards across both TensorCores on v7x; a partial block's second-minor
        # dim must stay sublane-aligned.
        tn = min(tn, _round_up(pl.cdiv(n, 8), row_align))
        tn = max(row_align, (tn // row_align) * row_align)
    # Ragged last block: rows are independent, out-of-range rows are dropped
    # on store, so no wrapper-side pad / slice (no extra HBM pass).
    grid = (pl.cdiv(n, tn),)

    kernel = functools.partial(
        _vec_layer_norm_kernel, splits=splits, h=h, norm_type=norm_type)

    out = pl.pallas_call(
        kernel,
        out_shape=jax.ShapeDtypeStruct((n, lw), out_dtype),
        grid=grid,
        in_specs=[
            pl.BlockSpec((tn, lw), lambda i: (i, 0)),   # vec, tiled over nodes
            pl.BlockSpec((1, h), lambda i: (0, 0)),     # weight, VMEM-resident
        ],
        out_specs=pl.BlockSpec((tn, lw), lambda i: (i, 0)),
        compiler_params=pltpu.CompilerParams(
            dimension_semantics=("parallel",)),
    )(vec2, w)

    return out.reshape(n, l, h)


# ----------------------------------------------------------------------------
# Plain-JAX reference (mirrors the torch module) for correctness checks.
# ----------------------------------------------------------------------------
def _ref_max_min_norm(vec, eps=EPS):
    dist = jnp.sqrt(jnp.sum(vec * vec, axis=1, keepdims=True))
    dist = jnp.maximum(dist, eps)
    direct = vec / dist
    max_val = jnp.max(dist, axis=-1, keepdims=True)
    min_val = jnp.min(dist, axis=-1, keepdims=True)
    delta = max_val - min_val
    delta = jnp.where(delta == 0.0, jnp.ones_like(delta), delta)
    d = (dist - min_val) / delta
    return jnp.maximum(d, 0.0) * direct


def ref_forward(vec, weight, norm_type="max_min"):
    l = vec.shape[1]
    if l == 3:
        v = _ref_max_min_norm(vec) if norm_type == "max_min" else vec
        return v * weight[None, None, :]
    elif l == 8:
        v1, v2 = vec[:, :3, :], vec[:, 3:, :]
        if norm_type == "max_min":
            v1 = _ref_max_min_norm(v1)
            v2 = _ref_max_min_norm(v2)
        return jnp.concatenate([v1, v2], axis=1) * weight[None, None, :]
    raise ValueError(f"only 3 or 8 channels supported (got {l})")


if __name__ == "__main__":
    key = jax.random.PRNGKey(0)
    k1, k2, k3, k4, k5 = jax.random.split(key, 5)

    hidden = 32     # hidden_channels
    n_nodes = 8     # number of nodes

    # Module initializes the weight to ones; use a random (trainable-style)
    # weight to exercise the scaling path.
    weight = jax.random.normal(k3, (hidden,), dtype=jnp.float32)

    # L == 3 case (max_min norm)
    vec3 = jax.random.normal(k1, (n_nodes, 3, hidden), dtype=jnp.float32)
    out3 = jax.block_until_ready(vec_layer_norm(vec3, weight))
    assert out3.shape == vec3.shape and out3.dtype == vec3.dtype
    assert jnp.allclose(out3, ref_forward(vec3, weight), atol=2e-5, rtol=1e-5)

    # L == 8 case (split 3/5, max_min norm)
    vec8 = jax.random.normal(k2, (n_nodes, 8, hidden), dtype=jnp.float32)
    out8 = jax.block_until_ready(vec_layer_norm(vec8, weight))
    assert out8.shape == vec8.shape
    assert jnp.allclose(out8, ref_forward(vec8, weight), atol=2e-5, rtol=1e-5)

    # Ragged node count (N not a multiple of the row tile -> ragged last block)
    vec3b = jax.random.normal(k4, (10, 3, hidden), dtype=jnp.float32)
    out3b = jax.block_until_ready(vec_layer_norm(vec3b, weight, row_tile=4))
    assert jnp.allclose(out3b, ref_forward(vec3b, weight), atol=2e-5, rtol=1e-5)

    # norm_type=None path (weight scaling only)
    out_none = jax.block_until_ready(vec_layer_norm(vec8, weight, norm_type=None))
    assert jnp.allclose(out_none, ref_forward(vec8, weight, norm_type=None),
                        atol=2e-5, rtol=1e-5)

    # bf16 pass-through (bf16 HBM traffic, f32 compute inside the kernel)
    vec8b = jax.random.normal(k5, (n_nodes, 8, hidden), dtype=jnp.bfloat16)
    outb = jax.block_until_ready(vec_layer_norm(vec8b, weight))
    refb = ref_forward(vec8b.astype(jnp.float32), weight)
    assert outb.dtype == jnp.bfloat16
    assert jnp.allclose(outb.astype(jnp.float32), refb, atol=2e-2, rtol=2e-2)

    print("KERNEL_OK")
</pallas_src>

<mosaic_0001>
module attributes {stable_mosaic.version = 11 : i64} {
  func.func @_vec_layer_norm_kernel(%arg0: i32, %arg1: memref<8x96xf32, #tpu.memory_space<vmem>>, %arg2: memref<1x32xf32, #tpu.memory_space<vmem>>, %arg3: memref<8x96xf32, #tpu.memory_space<vmem>>) attributes {dimension_semantics = [#tpu.dimension_semantics<parallel>], iteration_bounds = array<i64: 1>, scalar_prefetch = 0 : i64, scratch_operands = 0 : i64, tpu.core_type = #tpu.core_type<tc>, window_params = [{transform_indices = @transform_0, window_bounds = array<i64: 8, 96>}, {pipeline_mode = #tpu.pipeline_mode<synchronous>, transform_indices = @transform_1, window_bounds = array<i64: 1, 32>}, {transform_indices = @transform_2, window_bounds = array<i64: 8, 96>}]} {
    %c0 = arith.constant 0 : index
    %c0_0 = arith.constant 0 : index
    %0 = vector.load %arg1[%c0, %c0_0] : memref<8x96xf32, #tpu.memory_space<vmem>>, vector<8x96xf32>
    %c0_1 = arith.constant 0 : index
    %c0_2 = arith.constant 0 : index
    %1 = vector.load %arg2[%c0_1, %c0_2] : memref<1x32xf32, #tpu.memory_space<vmem>>, vector<1x32xf32>
    %2 = vector.extract_strided_slice %0 {offsets = [0, 0], sizes = [8, 32], strides = [1, 1]} : vector<8x96xf32> to vector<8x32xf32>
    %3 = arith.mulf %2, %2 : vector<8x32xf32>
    %4 = vector.extract_strided_slice %0 {offsets = [0, 32], sizes = [8, 32], strides = [1, 1]} : vector<8x96xf32> to vector<8x32xf32>
    %5 = arith.mulf %4, %4 : vector<8x32xf32>
    %6 = arith.addf %3, %5 : vector<8x32xf32>
    %7 = vector.extract_strided_slice %0 {offsets = [0, 64], sizes = [8, 32], strides = [1, 1]} : vector<8x96xf32> to vector<8x32xf32>
    %8 = arith.mulf %7, %7 : vector<8x32xf32>
    %9 = arith.addf %6, %8 : vector<8x32xf32>
    %cst = arith.constant 1.000000e-24 : f32
    %10 = vector.broadcast %cst : f32 to vector<8x32xf32>
    %11 = arith.maximumf %9, %10 : vector<8x32xf32>
    %12 = math.rsqrt %11 : vector<8x32xf32>
    %13 = arith.mulf %9, %12 : vector<8x32xf32>
    %cst_3 = arith.constant 9.99999996E-13 : f32
    %14 = vector.broadcast %cst_3 : f32 to vector<8x32xf32>
    %15 = arith.maximumf %13, %14 : vector<8x32xf32>
    %cst_4 = arith.constant dense<0xFF800000> : vector<8xf32>
    %16 = vector.multi_reduction <maximumf>, %15, %cst_4 [1] : vector<8x32xf32> to vector<8xf32>
    %17 = vector.shape_cast %16 : vector<8xf32> to vector<8x1xf32>
    %cst_5 = arith.constant dense<0x7F800000> : vector<8xf32>
    %18 = vector.multi_reduction <minimumf>, %15, %cst_5 [1] : vector<8x32xf32> to vector<8xf32>
    %19 = vector.shape_cast %18 : vector<8xf32> to vector<8x1xf32>
    %20 = arith.subf %17, %19 : vector<8x1xf32>
    %cst_6 = arith.constant 0.000000e+00 : f32
    %21 = vector.broadcast %cst_6 : f32 to vector<8x1xf32>
    %22 = arith.cmpf oeq, %20, %21 : vector<8x1xf32>
    %cst_7 = arith.constant 1.000000e+00 : f32
    %23 = vector.broadcast %cst_7 : f32 to vector<8x1xf32>
    %24 = arith.select %22, %23, %20 : vector<8x1xi1>, vector<8x1xf32>
    %25 = tpu.reciprocal %24 : vector<8x1xf32> -> vector<8x1xf32>
    %26 = vector.broadcast %19 : vector<8x1xf32> to vector<8x32xf32>
    %27 = arith.subf %15, %26 : vector<8x32xf32>
    %28 = vector.broadcast %25 : vector<8x1xf32> to vector<8x32xf32>
    %29 = arith.mulf %27, %28 : vector<8x32xf32>
    %cst_8 = arith.constant 0.000000e+00 : f32
    %30 = vector.broadcast %cst_8 : f32 to vector<8x32xf32>
    %31 = arith.maximumf %29, %30 : vector<8x32xf32>
    %32 = arith.mulf %31, %12 : vector<8x32xf32>
    %33 = vector.broadcast %1 : vector<1x32xf32> to vector<8x32xf32>
    %34 = arith.mulf %32, %33 : vector<8x32xf32>
    %35 = tpu.concatenate %34, %34, %34 in 1 : vector<8x32xf32>, vector<8x32xf32>, vector<8x32xf32> -> vector<8x96xf32>
    %36 = arith.mulf %0, %35 : vector<8x96xf32>
    %c0_9 = arith.constant 0 : index
    %c0_10 = arith.constant 0 : index
    %37 = vector.load %arg3[%c0_9, %c0_10] : memref<8x96xf32, #tpu.memory_space<vmem>>, vector<8x96xf32>
    tpu.vector_store %arg3[%c0_9, %c0_10], %36 {strides = array<i32>} : memref<8x96xf32, #tpu.memory_space<vmem>>, vector<8x96xf32>,
    return
  }
  func.func @transform_0(%arg0: i32) -> (i32, i32) {
    %c0_i32 = arith.constant 0 : i32
    %c0_i32_0 = arith.constant 0 : i32
    return %arg0, %c0_i32 : i32, i32
  }
  func.func @transform_1(%arg0: i32) -> (i32, i32) {
    %c0_i32 = arith.constant 0 : i32
    %c0_i32_0 = arith.constant 0 : i32
    %c0_i32_1 = arith.constant 0 : i32
    return %c0_i32, %c0_i32_0 : i32, i32
  }
  func.func @transform_2(%arg0: i32) -> (i32, i32) {
    %c0_i32 = arith.constant 0 : i32
    %c0_i32_0 = arith.constant 0 : i32
    return %arg0, %c0_i32 : i32, i32
  }
}

</mosaic_0001>

<llo_original>
// kernel: tpu_custom_call.1
$region0: #{tpu_custom_call.1}
  #allocation0 [shape = 'u32[]', space=smem, size = 0x4, offset = 0x4, fixed_abs, tag = 'smem constant byte address 0x4 - core index']
  #allocation1 [shape = 'u32[144,128]{1,0:T(1,128)}', space=vmem, size = 0x12000, scoped, tag = 'internal scratch']
  %s0 = inlined_call_operand.hbm [shape: f32[8,96], index: 0, kind: input, shape index: {}]
  %s1 = inlined_call_operand.vmem [shape: f32[1,32], index: 1, kind: input, shape index: {}]
  %s2 = inlined_call_operand.hbm [shape: f32[8,96], index: 2, kind: output, shape index: {}]
  %s3 = sld [smem:[#allocation0]]
  $region22: #{tpu_custom_call.1} parent=0
    _
  %s5 = ssub.s32 1, %s3
  %s6 = scalar_select 0, %s5, %s3
  $region1: #{tpu_custom_call.1} parent=0
    #allocation2 [shape = 'u8[4096]{0}', space=vmem, size = 0x1000, scoped, tag = 'input window, operand 0, single buffered']
    #allocation3 [shape = 's32[1]{0}', space=sflag, size = 0x4, scoped, tag = 'scoped memory for tpu_custom_call.1']
    #allocation4 [shape = 's32[1]{0}', space=sflag, size = 0x4, scoped, tag = 'scoped memory for tpu_custom_call.1']
    #allocation5 [shape = 'u8[4096]{0}', space=vmem, size = 0x1000, scoped, tag = 'output window, operand 0, single buffered']
    %7 = vsyncpa [#allocation3], 0
    %8 = vsyncpa [#allocation4], 0
    // Predicated region
    $region2: #{tpu_custom_call.1} parent=1 // pred_check
      _
    $region3: #{tpu_custom_call.1} parent=1 // pred_check_branch
      %10 = sbr.rel (0) target = $region5
    $region4: #{tpu_custom_call.1} parent=1 // pred_region
      %s12 = ssub.s32 128, 128
      %13 = vsyncadd [#allocation3], %s12
      %s15 = sshll.u32 [#allocation2], 4
      %s16 = int_to_ptr.vmem [resolvable:$true] %s15
      %18 = dma.hbm_to_vmem [thread:$0]  %s0, 128, %s16, [#allocation3]
    $region5: #{tpu_custom_call.1} parent=1 // pred_fallthru
      _
    // Predicated region
    $region6: #{tpu_custom_call.1} parent=1 // pred_check
      _
    $region7: #{tpu_custom_call.1} parent=1 // pred_check_branch
      %20 = sbr.rel (0) target = $region9
    $region8: #{tpu_custom_call.1} parent=1 // pred_region
      _
    $region9: #{tpu_custom_call.1} parent=1 // pred_fallthru
      _
    // Predicated region
    $region10: #{tpu_custom_call.1} parent=1 // pred_check
      _
    $region11: #{tpu_custom_call.1} parent=1 // pred_check_branch
      %22 = sbr.rel (0) target = $region13
    $region12: #{tpu_custom_call.1} parent=1 // pred_region
      %23 = dma.done [#allocation3], 128
    $region13: #{tpu_custom_call.1} parent=1 // pred_fallthru
      _
    %v24 = vld [vmem:[#allocation2] sm:$0xff]
    %v25 = vld [vmem:[%s1] sm:$0x1]
    %v26 = vmul.f32 %v24, %v24
    %28 = vrot.lane.b32.xlu0 %v26, 96
    %v29 = vpop.permute.xlu0 %28
    %v31 = vadd.f32 %v26, %v29
    %32 = vrot.lane.b32.xlu0 %v26, 64
    %v33 = vpop.permute.xlu0 %32
    %v35 = vadd.f32 %v31, %v33
    %v36 = vmax.f32 %v35, 1e-24
    %v37 = vrsqrt.pop %v36
    %v38 = vmul.f32 %v35, %v37
    %v39 = vmax.f32 %v38, 1e-12
    %vm40 = vcmask 261120
    %v41 = vsel %vm40, %v39, -inf
    %42 = vmax.xlane.f32.xlu0 %v41
    %v43 = vpop.xlane.xlu0 %42
    %v44 = vsel %vm40, %v39, inf
    %45 = vmin.xlane.f32.xlu0 %v44
    %v46 = vpop.xlane.xlu0 %45
    %v47 = vsub.f32 %v43, %v46
    %vm48 = vcmp.eq.f32.partialorder %v47, 0.0
    %v49 = vsel %vm48, 1.0, %v47
    %v50 = vrcp.pop %v49
    %v51 = vsub.f32 %v39, %v46
    %v52 = vmul.f32 %v51, %v50
    %v53 = vmax.f32 %v52, 0.0
    %v54 = vmul.f32 %v53, %v37
    %v56 = vlaneseq
    %v57 = vshrl.u32 %v56, 7
    %v58 = vsub.s32 0, %v57
    %v59 = vrot.slane %v25, %v58
    %v61 = vmul.f32 %v54, %v59
    %63 = vrot.lane.b32.xlu0 %v61, 32
    %v64 = vpop.permute.xlu0 %63
    %66 = vrot.lane.b32.xlu0 %v61, 64
    %v67 = vpop.permute.xlu0 %66
    %v69 = vsel %vm40, %v61, %v64
    %vm70 = vcmask 523264
    %v71 = vsel %vm70, %v69, %v67
    %v72 = vmul.f32 %v24, %v71
    %vm73 = vcmask 785408
    %74 = vst.msk [vmem:[#allocation5] sm:$0xff] %vm73, %v72
    // Predicated region
    $region14: #{tpu_custom_call.1} parent=1 // pred_check
      _
    $region15: #{tpu_custom_call.1} parent=1 // pred_check_branch
      %76 = sbr.rel (0) target = $region17
    $region16: #{tpu_custom_call.1} parent=1 // pred_region
      %s78 = ssub.s32 128, 128
      %79 = vsyncadd [#allocation4], %s78
      %s81 = sshll.u32 [#allocation5], 4
      %s82 = int_to_ptr.vmem [resolvable:$true] %s81
      %84 = dma.vmem_to_hbm [thread:$0]  %s82, 128, %s2, [#allocation4]
    $region17: #{tpu_custom_call.1} parent=1 // pred_fallthru
      _
    // Predicated region
    $region18: #{tpu_custom_call.1} parent=1 // pred_check
      _
    $region19: #{tpu_custom_call.1} parent=1 // pred_check_branch
      %86 = sbr.rel (0) target = $region21
    $region20: #{tpu_custom_call.1} parent=1 // pred_region
      %87 = dma.done [#allocation4], 128
    $region21: #{tpu_custom_call.1} parent=1 // pred_fallthru
      _
    %88 = vsyncpa [#allocation3], 1
    %89 = vsyncpa [#allocation4], 1

</llo_original>
